<compile_context>
chip_gen: v7x
topology: tpu7x:2x2x1
jax: 0.10.0
libtpu: 0.0.40
codegen_flags: <defaults>
</compile_context>

<pallas_src>
import functools
import math

import jax
import jax.numpy as jnp
from jax.experimental import pallas as pl
from jax.experimental.pallas import tpu as pltpu

DIM = 64            # config.dim
D_IN = 2 * DIM      # fc1 input features
OUT = 166           # fc3 output features (fixed by the module)


def _round_up(x, m):
    return (x + m - 1) // m * m


def _erf_poly(z):
    # Abramowitz & Stegun 7.1.26 rational approximation of erf, |err| <= 1.5e-7
    # (well below f32 noise).  Uses only abs/mul/add/div/exp so it lowers on
    # every TPU generation regardless of math.erf support.
    a1, a2, a3, a4, a5 = (0.254829592, -0.284496736, 1.421413741,
                          -1.453152027, 1.061405429)
    p = 0.3275911
    za = jnp.abs(z)
    t = 1.0 / (1.0 + p * za)
    poly = ((((a5 * t + a4) * t + a3) * t + a2) * t + a1) * t
    e = 1.0 - poly * jnp.exp(-za * za)
    return jnp.where(z < 0, -e, e)


def _gelu(x, approx):
    if approx:
        # tanh approximation -> EUP slot; recommended on v7x where the erf
        # polynomial would otherwise make the VALU the binding slot.
        return jax.nn.gelu(x, approximate=True)
    # "exact" erf-based GELU: matches torch.nn.functional.gelu default.
    return 0.5 * x * (1.0 + _erf_poly(x * 0.7071067811865476))


def _mlp_kernel(x_ref, w1_ref, b1_ref, w2_ref, b2_ref, w3_ref, b3_ref, o_ref,
                *, gelu_approx):
    # x stays f32 in HBM; cast to the weights' compute dtype in-kernel (free,
    # VPU slack) instead of an extra HBM astype pass in the wrapper.
    x = x_ref[...].astype(w1_ref.dtype)                              # (tm, 2*DIM)
    h = jnp.dot(x, w1_ref[...], preferred_element_type=jnp.float32)
    h = _gelu(h + b1_ref[...], gelu_approx)                          # f32 (tm, DIM)
    h = jnp.dot(h.astype(w2_ref.dtype), w2_ref[...],
                preferred_element_type=jnp.float32)
    h = _gelu(h + b2_ref[...], gelu_approx)                          # f32 (tm, DIM)
    o = jnp.dot(h.astype(w3_ref.dtype), w3_ref[...],
                preferred_element_type=jnp.float32)
    o_ref[...] = (o + b3_ref[...]).astype(o_ref.dtype)               # (tm, OUT)


@functools.partial(jax.jit,
                   static_argnames=("tm", "use_bf16", "gelu_approx", "out_dtype"))
def residual_mlp(x, w1, b1, w2, b2, w3, b3, *, tm=2048, use_bf16=True,
                 gelu_approx=False, out_dtype=jnp.float32):
    """x: [N, 2*DIM] f32. Weights are [in, out] (transposed vs nn.Linear); biases [1, out].

    use_bf16=True casts x (in-kernel) and the weights to bf16 before the MXU
    (f32 accumulate) -- a real numerics change vs the f32 PyTorch module.
    out_dtype=jnp.bfloat16 additionally stores the output in bf16 (halves the
    dominant HBM write stream) for consumers that tolerate it.
    """
    n, d_in = x.shape
    assert d_in == D_IN

    # Row tile: clamp to the problem size, and make sure the 'parallel' grid
    # axis has at least 2 steps whenever there is enough work to split so that
    # both v7x TensorCores get a tile.  Non-divisible tails are handled by
    # Pallas' partial-block masking (no wrapper-side padding).
    tm_eff = min(tm, _round_up(n, 8))
    if n > 8:
        tm_eff = min(tm_eff, _round_up(pl.cdiv(n, 2), 8))
    grid = (pl.cdiv(n, tm_eff),)

    if use_bf16:
        # Weights are tiny (~50 KB total): a one-time wrapper cast is noise.
        # Biases stay f32 and are added to the f32 accumulator.
        w1c, w2c, w3c = (w.astype(jnp.bfloat16) for w in (w1, w2, w3))
    else:
        w1c, w2c, w3c = w1, w2, w3

    # VMEM budget: double-buffered x / out tiles + resident weights, with
    # headroom.  Only matters on v5e (16 MiB default scoped limit) when tm is
    # pushed to 4K+; capped well below v7x's 64 MiB physical VMEM.
    x_bytes = 4
    out_bytes = jnp.dtype(out_dtype).itemsize
    w_bytes = 2 if use_bf16 else 4
    vmem_need = (2 * tm_eff * (D_IN * x_bytes + OUT * out_bytes)
                 + (D_IN * DIM + DIM * DIM + DIM * OUT) * w_bytes
                 + (2 * DIM + OUT) * 4)
    vmem_limit = int(min(max(2 * vmem_need, 16 * 2**20), 48 * 2**20))

    full = lambda i: (0, 0)           # weights/biases resident for every tile
    kernel = functools.partial(_mlp_kernel, gelu_approx=gelu_approx)

    return pl.pallas_call(
        kernel,
        out_shape=jax.ShapeDtypeStruct((n, OUT), out_dtype),
        grid_spec=pltpu.PrefetchScalarGridSpec(
            num_scalar_prefetch=0,
            grid=grid,
            in_specs=[
                pl.BlockSpec((tm_eff, D_IN), lambda i: (i, 0)),   # x tile
                pl.BlockSpec((D_IN, DIM), full),                  # w1
                pl.BlockSpec((1, DIM), full),                     # b1
                pl.BlockSpec((DIM, DIM), full),                   # w2
                pl.BlockSpec((1, DIM), full),                     # b2
                pl.BlockSpec((DIM, OUT), full),                   # w3
                pl.BlockSpec((1, OUT), full),                     # b3
            ],
            out_specs=pl.BlockSpec((tm_eff, OUT), lambda i: (i, 0)),
        ),
        compiler_params=pltpu.CompilerParams(
            dimension_semantics=("parallel",),
            vmem_limit_bytes=vmem_limit),
    )(x, w1c, b1, w2c, b2, w3c, b3)


def _init_linear(key, fan_in, fan_out):
    # Deterministic init mimicking nn.Linear's uniform(-1/sqrt(fan_in), ...).
    kw, kb = jax.random.split(key)
    bound = 1.0 / math.sqrt(fan_in)
    w = jax.random.uniform(kw, (fan_in, fan_out), jnp.float32, -bound, bound)
    b = jax.random.uniform(kb, (1, fan_out), jnp.float32, -bound, bound)
    return w, b


if __name__ == "__main__":
    key = jax.random.PRNGKey(0)
    kx, k1, k2, k3 = jax.random.split(key, 4)

    batch, seq = 2, 8
    x = jax.random.normal(kx, (batch, seq, 2 * DIM), jnp.float32)

    w1, b1 = _init_linear(k1, 2 * DIM, DIM)
    w2, b2 = _init_linear(k2, DIM, DIM)
    w3, b3 = _init_linear(k3, DIM, OUT)

    x2d = x.reshape(batch * seq, 2 * DIM)

    hp = jax.lax.Precision.HIGHEST

    def ref_forward(approx):
        if approx:
            g = lambda v: jax.nn.gelu(v, approximate=True)
        else:
            g = lambda v: 0.5 * v * (1.0 + jax.lax.erf(v * 0.7071067811865476))
        h = g(jnp.dot(x2d, w1, precision=hp) + b1)
        h = g(jnp.dot(h, w2, precision=hp) + b2)
        return (jnp.dot(h, w3, precision=hp) + b3).reshape(batch, seq, OUT)

    ref = ref_forward(False)

    # 1) f32 path, exact GELU: semantic parity with the PyTorch module.
    out = residual_mlp(x2d, w1, b1, w2, b2, w3, b3,
                       use_bf16=False, gelu_approx=False,
                       out_dtype=jnp.float32).reshape(batch, seq, OUT)
    jax.block_until_ready(out)
    assert out.shape == (batch, seq, OUT)
    err = float(jnp.max(jnp.abs(out - ref)))
    assert err < 2e-2, f"f32 path max err {err}"

    # 2) fast path: bf16 MXU inputs + bf16 output store (perf default for
    #    mem-bound deployments); loose tolerance for bf16 rounding.
    out_fast = residual_mlp(x2d, w1, b1, w2, b2, w3, b3,
                            use_bf16=True, gelu_approx=False,
                            out_dtype=jnp.bfloat16)
    out_fast = out_fast.astype(jnp.float32).reshape(batch, seq, OUT)
    jax.block_until_ready(out_fast)
    err_fast = float(jnp.max(jnp.abs(out_fast - ref)))
    assert err_fast < 1e-1, f"bf16 path max err {err_fast}"

    # 3) tanh-approx GELU path (EUP slot; recommended on v7x), checked against
    #    a matching tanh-GELU reference.
    ref_tanh = ref_forward(True)
    out_tanh = residual_mlp(x2d, w1, b1, w2, b2, w3, b3,
                            use_bf16=True, gelu_approx=True,
                            out_dtype=jnp.bfloat16)
    out_tanh = out_tanh.astype(jnp.float32).reshape(batch, seq, OUT)
    jax.block_until_ready(out_tanh)
    err_tanh = float(jnp.max(jnp.abs(out_tanh - ref_tanh)))
    assert err_tanh < 1e-1, f"tanh path max err {err_tanh}"

    print("KERNEL_OK")
</pallas_src>

<mosaic_0001>
module attributes {stable_mosaic.version = 11 : i64} {
  func.func @_mlp_kernel(%arg0: i32, %arg1: memref<8x128xf32, #tpu.memory_space<vmem>>, %arg2: memref<128x64xf32, #tpu.memory_space<vmem>>, %arg3: memref<1x64xf32, #tpu.memory_space<vmem>>, %arg4: memref<64x64xf32, #tpu.memory_space<vmem>>, %arg5: memref<1x64xf32, #tpu.memory_space<vmem>>, %arg6: memref<64x166xf32, #tpu.memory_space<vmem>>, %arg7: memref<1x166xf32, #tpu.memory_space<vmem>>, %arg8: memref<8x166xf32, #tpu.memory_space<vmem>>) attributes {dimension_semantics = [#tpu.dimension_semantics<parallel>], iteration_bounds = array<i64: 2>, scalar_prefetch = 0 : i64, scratch_operands = 0 : i64, tpu.core_type = #tpu.core_type<tc>, window_params = [{transform_indices = @transform_0, window_bounds = array<i64: 8, 128>}, {pipeline_mode = #tpu.pipeline_mode<synchronous>, transform_indices = @transform_1, window_bounds = array<i64: 128, 64>}, {pipeline_mode = #tpu.pipeline_mode<synchronous>, transform_indices = @transform_2, window_bounds = array<i64: 1, 64>}, {pipeline_mode = #tpu.pipeline_mode<synchronous>, transform_indices = @transform_3, window_bounds = array<i64: 64, 64>}, {pipeline_mode = #tpu.pipeline_mode<synchronous>, transform_indices = @transform_4, window_bounds = array<i64: 1, 64>}, {pipeline_mode = #tpu.pipeline_mode<synchronous>, transform_indices = @transform_5, window_bounds = array<i64: 64, 166>}, {pipeline_mode = #tpu.pipeline_mode<synchronous>, transform_indices = @transform_6, window_bounds = array<i64: 1, 166>}, {transform_indices = @transform_7, window_bounds = array<i64: 8, 166>}]} {
    %c0 = arith.constant 0 : index
    %c0_0 = arith.constant 0 : index
    %0 = vector.load %arg1[%c0, %c0_0] : memref<8x128xf32, #tpu.memory_space<vmem>>, vector<8x128xf32>
    %c0_1 = arith.constant 0 : index
    %c0_2 = arith.constant 0 : index
    %1 = vector.load %arg2[%c0_1, %c0_2] : memref<128x64xf32, #tpu.memory_space<vmem>>, vector<128x64xf32>
    %cst = arith.constant dense<0.000000e+00> : vector<8x64xf32>
    %2 = tpu.matmul %0, %1, %cst {dimension_numbers = #tpu.dot_dimension_numbers<[1], [0], [0], [1], [0, 0, 1, 1], [], []>} : vector<8x128xf32>, vector<128x64xf32>, vector<8x64xf32> -> vector<8x64xf32>
    %c0_3 = arith.constant 0 : index
    %c0_4 = arith.constant 0 : index
    %3 = vector.load %arg3[%c0_3, %c0_4] : memref<1x64xf32, #tpu.memory_space<vmem>>, vector<1x64xf32>
    %4 = vector.broadcast %3 : vector<1x64xf32> to vector<8x64xf32>
    %5 = arith.addf %2, %4 : vector<8x64xf32>
    %cst_5 = arith.constant 5.000000e-01 : f32
    %6 = vector.broadcast %cst_5 : f32 to vector<8x64xf32>
    %7 = arith.mulf %6, %5 : vector<8x64xf32>
    %cst_6 = arith.constant 0.707106769 : f32
    %8 = vector.broadcast %cst_6 : f32 to vector<8x64xf32>
    %9 = arith.mulf %5, %8 : vector<8x64xf32>
    %10 = math.absf %9 : vector<8x64xf32>
    %cst_7 = arith.constant 0.327591091 : f32
    %11 = vector.broadcast %cst_7 : f32 to vector<8x64xf32>
    %12 = arith.mulf %11, %10 : vector<8x64xf32>
    %cst_8 = arith.constant 1.000000e+00 : f32
    %13 = vector.broadcast %cst_8 : f32 to vector<8x64xf32>
    %14 = arith.addf %13, %12 : vector<8x64xf32>
    %cst_9 = arith.constant 1.000000e+00 : f32
    %15 = vector.broadcast %cst_9 : f32 to vector<8x64xf32>
    %16 = arith.divf %15, %14 : vector<8x64xf32>
    %cst_10 = arith.constant 1.06140542 : f32
    %17 = vector.broadcast %cst_10 : f32 to vector<8x64xf32>
    %18 = arith.mulf %17, %16 : vector<8x64xf32>
    %cst_11 = arith.constant -1.45315206 : f32
    %19 = vector.broadcast %cst_11 : f32 to vector<8x64xf32>
    %20 = arith.addf %18, %19 : vector<8x64xf32>
    %21 = arith.mulf %20, %16 : vector<8x64xf32>
    %cst_12 = arith.constant 1.42141378 : f32
    %22 = vector.broadcast %cst_12 : f32 to vector<8x64xf32>
    %23 = arith.addf %21, %22 : vector<8x64xf32>
    %24 = arith.mulf %23, %16 : vector<8x64xf32>
    %cst_13 = arith.constant -0.284496725 : f32
    %25 = vector.broadcast %cst_13 : f32 to vector<8x64xf32>
    %26 = arith.addf %24, %25 : vector<8x64xf32>
    %27 = arith.mulf %26, %16 : vector<8x64xf32>
    %cst_14 = arith.constant 0.254829586 : f32
    %28 = vector.broadcast %cst_14 : f32 to vector<8x64xf32>
    %29 = arith.addf %27, %28 : vector<8x64xf32>
    %30 = arith.mulf %29, %16 : vector<8x64xf32>
    %cst_15 = arith.constant 0.000000e+00 : f32
    %31 = vector.broadcast %cst_15 : f32 to vector<8x64xf32>
    %32 = arith.subf %31, %10 : vector<8x64xf32>
    %33 = arith.mulf %32, %10 : vector<8x64xf32>
    %34 = math.exp %33 : vector<8x64xf32>
    %35 = arith.mulf %30, %34 : vector<8x64xf32>
    %cst_16 = arith.constant 1.000000e+00 : f32
    %36 = vector.broadcast %cst_16 : f32 to vector<8x64xf32>
    %37 = arith.subf %36, %35 : vector<8x64xf32>
    %cst_17 = arith.constant 0.000000e+00 : f32
    %38 = vector.broadcast %cst_17 : f32 to vector<8x64xf32>
    %39 = arith.cmpf olt, %9, %38 : vector<8x64xf32>
    %cst_18 = arith.constant 0.000000e+00 : f32
    %40 = vector.broadcast %cst_18 : f32 to vector<8x64xf32>
    %41 = arith.subf %40, %37 : vector<8x64xf32>
    %42 = arith.select %39, %41, %37 : vector<8x64xi1>, vector<8x64xf32>
    %cst_19 = arith.constant 1.000000e+00 : f32
    %43 = vector.broadcast %cst_19 : f32 to vector<8x64xf32>
    %44 = arith.addf %43, %42 : vector<8x64xf32>
    %45 = arith.mulf %7, %44 : vector<8x64xf32>
    %c0_20 = arith.constant 0 : index
    %c0_21 = arith.constant 0 : index
    %46 = vector.load %arg4[%c0_20, %c0_21] : memref<64x64xf32, #tpu.memory_space<vmem>>, vector<64x64xf32>
    %cst_22 = arith.constant dense<0.000000e+00> : vector<8x64xf32>
    %47 = tpu.matmul %45, %46, %cst_22 {dimension_numbers = #tpu.dot_dimension_numbers<[1], [0], [0], [1], [0, 0, 1, 1], [], []>} : vector<8x64xf32>, vector<64x64xf32>, vector<8x64xf32> -> vector<8x64xf32>
    %c0_23 = arith.constant 0 : index
    %c0_24 = arith.constant 0 : index
    %48 = vector.load %arg5[%c0_23, %c0_24] : memref<1x64xf32, #tpu.memory_space<vmem>>, vector<1x64xf32>
    %49 = vector.broadcast %48 : vector<1x64xf32> to vector<8x64xf32>
    %50 = arith.addf %47, %49 : vector<8x64xf32>
    %cst_25 = arith.constant 5.000000e-01 : f32
    %51 = vector.broadcast %cst_25 : f32 to vector<8x64xf32>
    %52 = arith.mulf %51, %50 : vector<8x64xf32>
    %cst_26 = arith.constant 0.707106769 : f32
    %53 = vector.broadcast %cst_26 : f32 to vector<8x64xf32>
    %54 = arith.mulf %50, %53 : vector<8x64xf32>
    %55 = math.absf %54 : vector<8x64xf32>
    %cst_27 = arith.constant 0.327591091 : f32
    %56 = vector.broadcast %cst_27 : f32 to vector<8x64xf32>
    %57 = arith.mulf %56, %55 : vector<8x64xf32>
    %cst_28 = arith.constant 1.000000e+00 : f32
    %58 = vector.broadcast %cst_28 : f32 to vector<8x64xf32>
    %59 = arith.addf %58, %57 : vector<8x64xf32>
    %cst_29 = arith.constant 1.000000e+00 : f32
    %60 = vector.broadcast %cst_29 : f32 to vector<8x64xf32>
    %61 = arith.divf %60, %59 : vector<8x64xf32>
    %cst_30 = arith.constant 1.06140542 : f32
    %62 = vector.broadcast %cst_30 : f32 to vector<8x64xf32>
    %63 = arith.mulf %62, %61 : vector<8x64xf32>
    %cst_31 = arith.constant -1.45315206 : f32
    %64 = vector.broadcast %cst_31 : f32 to vector<8x64xf32>
    %65 = arith.addf %63, %64 : vector<8x64xf32>
    %66 = arith.mulf %65, %61 : vector<8x64xf32>
    %cst_32 = arith.constant 1.42141378 : f32
    %67 = vector.broadcast %cst_32 : f32 to vector<8x64xf32>
    %68 = arith.addf %66, %67 : vector<8x64xf32>
    %69 = arith.mulf %68, %61 : vector<8x64xf32>
    %cst_33 = arith.constant -0.284496725 : f32
    %70 = vector.broadcast %cst_33 : f32 to vector<8x64xf32>
    %71 = arith.addf %69, %70 : vector<8x64xf32>
    %72 = arith.mulf %71, %61 : vector<8x64xf32>
    %cst_34 = arith.constant 0.254829586 : f32
    %73 = vector.broadcast %cst_34 : f32 to vector<8x64xf32>
    %74 = arith.addf %72, %73 : vector<8x64xf32>
    %75 = arith.mulf %74, %61 : vector<8x64xf32>
    %cst_35 = arith.constant 0.000000e+00 : f32
    %76 = vector.broadcast %cst_35 : f32 to vector<8x64xf32>
    %77 = arith.subf %76, %55 : vector<8x64xf32>
    %78 = arith.mulf %77, %55 : vector<8x64xf32>
    %79 = math.exp %78 : vector<8x64xf32>
    %80 = arith.mulf %75, %79 : vector<8x64xf32>
    %cst_36 = arith.constant 1.000000e+00 : f32
    %81 = vector.broadcast %cst_36 : f32 to vector<8x64xf32>
    %82 = arith.subf %81, %80 : vector<8x64xf32>
    %cst_37 = arith.constant 0.000000e+00 : f32
    %83 = vector.broadcast %cst_37 : f32 to vector<8x64xf32>
    %84 = arith.cmpf olt, %54, %83 : vector<8x64xf32>
    %cst_38 = arith.constant 0.000000e+00 : f32
    %85 = vector.broadcast %cst_38 : f32 to vector<8x64xf32>
    %86 = arith.subf %85, %82 : vector<8x64xf32>
    %87 = arith.select %84, %86, %82 : vector<8x64xi1>, vector<8x64xf32>
    %cst_39 = arith.constant 1.000000e+00 : f32
    %88 = vector.broadcast %cst_39 : f32 to vector<8x64xf32>
    %89 = arith.addf %88, %87 : vector<8x64xf32>
    %90 = arith.mulf %52, %89 : vector<8x64xf32>
    %c0_40 = arith.constant 0 : index
    %c0_41 = arith.constant 0 : index
    %91 = vector.load %arg6[%c0_40, %c0_41] : memref<64x166xf32, #tpu.memory_space<vmem>>, vector<64x166xf32>
    %cst_42 = arith.constant dense<0.000000e+00> : vector<8x166xf32>
    %92 = tpu.matmul %90, %91, %cst_42 {dimension_numbers = #tpu.dot_dimension_numbers<[1], [0], [0], [1], [0, 0, 1, 1], [], []>} : vector<8x64xf32>, vector<64x166xf32>, vector<8x166xf32> -> vector<8x166xf32>
    %c0_43 = arith.constant 0 : index
    %c0_44 = arith.constant 0 : index
    %93 = vector.load %arg7[%c0_43, %c0_44] : memref<1x166xf32, #tpu.memory_space<vmem>>, vector<1x166xf32>
    %94 = vector.broadcast %93 : vector<1x166xf32> to vector<8x166xf32>
    %95 = arith.addf %92, %94 : vector<8x166xf32>
    %c0_45 = arith.constant 0 : index
    %c0_46 = arith.constant 0 : index
    %96 = vector.load %arg8[%c0_45, %c0_46] : memref<8x166xf32, #tpu.memory_space<vmem>>, vector<8x166xf32>
    tpu.vector_store %arg8[%c0_45, %c0_46], %95 {strides = array<i32>} : memref<8x166xf32, #tpu.memory_space<vmem>>, vector<8x166xf32>,
    return
  }
  func.func @transform_0(%arg0: i32) -> (i32, i32) {
    %c0_i32 = arith.constant 0 : i32
    %c0_i32_0 = arith.constant 0 : i32
    return %arg0, %c0_i32 : i32, i32
  }
  func.func @transform_1(%arg0: i32) -> (i32, i32) {
    %c0_i32 = arith.constant 0 : i32
    %c0_i32_0 = arith.constant 0 : i32
    %c0_i32_1 = arith.constant 0 : i32
    return %c0_i32, %c0_i32_0 : i32, i32
  }
  func.func @transform_2(%arg0: i32) -> (i32, i32) {
    %c0_i32 = arith.constant 0 : i32
    %c0_i32_0 = arith.constant 0 : i32
    %c0_i32_1 = arith.constant 0 : i32
    return %c0_i32, %c0_i32_0 : i32, i32
  }
  func.func @transform_3(%arg0: i32) -> (i32, i32) {
    %c0_i32 = arith.constant 0 : i32
    %c0_i32_0 = arith.constant 0 : i32
    %c0_i32_1 = arith.constant 0 : i32
    return %c0_i32, %c0_i32_0 : i32, i32
  }
  func.func @transform_4(%arg0: i32) -> (i32, i32) {
    %c0_i32 = arith.constant 0 : i32
    %c0_i32_0 = arith.constant 0 : i32
    %c0_i32_1 = arith.constant 0 : i32
    return %c0_i32, %c0_i32_0 : i32, i32
  }
  func.func @transform_5(%arg0: i32) -> (i32, i32) {
    %c0_i32 = arith.constant 0 : i32
    %c0_i32_0 = arith.constant 0 : i32
    %c0_i32_1 = arith.constant 0 : i32
    return %c0_i32, %c0_i32_0 : i32, i32
  }
  func.func @transform_6(%arg0: i32) -> (i32, i32) {
    %c0_i32 = arith.constant 0 : i32
    %c0_i32_0 = arith.constant 0 : i32
    %c0_i32_1 = arith.constant 0 : i32
    return %c0_i32, %c0_i32_0 : i32, i32
  }
  func.func @transform_7(%arg0: i32) -> (i32, i32) {
    %c0_i32 = arith.constant 0 : i32
    %c0_i32_0 = arith.constant 0 : i32
    return %arg0, %c0_i32 : i32, i32
  }
}

</mosaic_0001>

<llo_original>
// kernel: residual_mlp.1
$region0: #{residual_mlp.1}
  #allocation0 [shape = 'u32[]', space=smem, size = 0x4, offset = 0x4, fixed_abs, tag = 'smem constant byte address 0x4 - core index']
  #allocation1 [shape = 'u32[144,128]{1,0:T(1,128)}', space=vmem, size = 0x12000, scoped, tag = 'internal scratch']
  %s0 = inlined_call_operand.vmem [shape: f32[16,128], index: 0, kind: input, shape index: {}]
  %s1 = inlined_call_operand.vmem [shape: f32[128,64], index: 1, kind: input, shape index: {}]
  %s2 = inlined_call_operand.hbm [shape: f32[1,64], index: 2, kind: input, shape index: {}]
  %s3 = inlined_call_operand.vmem [shape: f32[64,64], index: 3, kind: input, shape index: {}]
  %s4 = inlined_call_operand.hbm [shape: f32[1,64], index: 4, kind: input, shape index: {}]
  %s5 = inlined_call_operand.vmem [shape: f32[64,166], index: 5, kind: input, shape index: {}]
  %s6 = inlined_call_operand.vmem [shape: f32[1,166], index: 6, kind: input, shape index: {}]
  %s7 = inlined_call_operand.hbm [shape: f32[16,166], index: 7, kind: output, shape index: {}]
  %s8 = sld [smem:[#allocation0]]
  $region69: #{residual_mlp.1} parent=0
    _
  %s10 = ssub.s32 1, %s8
  %s11 = scalar_select 0, %s10, %s8
  $region1: #{residual_mlp.1} parent=0
    #allocation2 [shape = 'u8[512]{0}', space=vmem, size = 0x400, scoped, tag = 'input window, operand 2, single buffered']
    #allocation3 [shape = 's32[2]{0}', space=sflag, size = 0x8, scoped, tag = 'scoped memory for residual_mlp.1']
    #allocation4 [shape = 's32[2]{0}', space=sflag, size = 0x8, scoped, tag = 'scoped memory for residual_mlp.1']
    #allocation5 [shape = 'u8[512]{0}', space=vmem, size = 0x400, scoped, tag = 'input window, operand 4, single buffered']
    #allocation6 [shape = 's32[1]{0}', space=sflag, size = 0x4, scoped, tag = 'scoped memory for residual_mlp.1']
    #allocation7 [shape = 'u8[16384]{0}', space=vmem, size = 0x4000, scoped, tag = 'output window, operand 0']
    %12 = vsyncpa [#allocation3], 0
    %13 = vsyncpa [#allocation6], 0
    %14 = vsyncpa [#allocation4], 0
    %s15 = scalar_lea.sflag [#allocation4], 1
    %16 = vsyncpa %s15, 0
    loop: start=0, step=1, limit=4
    $region2: #{residual_mlp.1} parent=1 // loop_pre_header
      _
    $region3: #{residual_mlp.1} parent=1 // loop_header
      %s18 = sphi 0, %s22
      %p19 = scmp.ge.s32.totalorder %s18, 4
      %s28 = sphi 0, %s30
      %s31 = sphi 0, %s28
      %s32 = sphi 0, %s31
      %s48 = sphi 0, %s32
      %s52 = sphi 0, %s52
      %s54 = sphi 0, %s52
      %s55 = sphi 0, %s54
      %s69 = sphi 0, %s55
      %s73 = sphi 0, %s73
      %s75 = sphi 0, %s73
      %s76 = sphi 0, %s75
      %s90 = sphi 0, %s76
      %s94 = sphi 0, %s94
      %s96 = sphi 0, %s94
      %s97 = sphi 0, %s96
      %s111 = sphi 0, %s97
      %s115 = sphi 0, %s115
      %s117 = sphi 0, %s115
      %s118 = sphi 0, %s117
      %s132 = sphi 0, %s118
      %s136 = sphi 0, %s136
      %s138 = sphi 0, %s136
      %s139 = sphi 0, %s138
      %s153 = sphi 0, %s139
      %s157 = sphi 0, %s157
      %s159 = sphi 0, %s157
      %s160 = sphi 0, %s159
      %s174 = sphi 0, %s160
      %s180 = sphi 0, %s182
      %s183 = sphi 0, %s180
      %s184 = sphi 0, %s183
      %s200 = sphi 0, %s184
    $region4: #{residual_mlp.1} parent=1 // loop_header_branch
      %21 = sbr.rel (%p19) target = $region8
    $region5: #{residual_mlp.1} parent=1 // loop_body
      %s23 = ssub.s32 %s18, 1
      %s24 = ssub.s32 %s18, 2
      %s25 = sadd.s32 %s18, 1
      %s26 = ssub.s32 %s18, %s25
      %p27 = scmp.eq.s32.totalorder %s26, 0
      %s29 = sadd.s32 %s28, 1
      %s30 = scalar_select %p27, %s28, %s29
      %p33 = pneg %p27
      %p34 = scmp.eq.s32.totalorder %s18, 1
      %p35 = por %p33, %p34
      %p36 = scmp.ne.s32.totalorder %s28, %s31
      %p37 = scmp.eq.s32.totalorder %s18, 0
      %p38 = por %p36, %p37
      %p39 = scmp.ne.s32.totalorder %s28, %s31
      %p40 = scmp.eq.s32.totalorder %s23, 1
      %p41 = por %p39, %p40
      %p42 = scmp.ne.s32.totalorder %s31, %s32
      %p43 = scmp.eq.s32.totalorder %s23, 0
      %p44 = por %p42, %p43
      %p45 = scmp.ne.s32.totalorder %s31, %s32
      %p46 = scmp.eq.s32.totalorder %s24, 1
      %p47 = por %p45, %p46
      %p49 = scmp.ne.s32.totalorder %s32, %s48
      %p50 = scmp.eq.s32.totalorder %s24, 0
      %p51 = por %p49, %p50
      %s53 = sadd.s32 %s52, 1
      %p56 = scmp.eq.s32.totalorder %s18, 1
      %p57 = scmp.ne.s32.totalorder %s52, %s54
      %p58 = scmp.eq.s32.totalorder %s18, 0
      %p59 = por %p57, %p58
      %p60 = scmp.ne.s32.totalorder %s52, %s54
      %p61 = scmp.eq.s32.totalorder %s23, 1
      %p62 = por %p60, %p61
      %p63 = scmp.ne.s32.totalorder %s54, %s55
      %p64 = scmp.eq.s32.totalorder %s23, 0
      %p65 = por %p63, %p64
      %p66 = scmp.ne.s32.totalorder %s54, %s55
      %p67 = scmp.eq.s32.totalorder %s24, 1
      %p68 = por %p66, %p67
      %p70 = scmp.ne.s32.totalorder %s55, %s69
      %p71 = scmp.eq.s32.totalorder %s24, 0
      %p72 = por %p70, %p71
      %s74 = sadd.s32 %s73, 1
      %p77 = scmp.eq.s32.totalorder %s18, 1
      %p78 = scmp.ne.s32.totalorder %s73, %s75
      %p79 = scmp.eq.s32.totalorder %s18, 0
      %p80 = por %p78, %p79
      %p81 = scmp.ne.s32.totalorder %s73, %s75
      %p82 = scmp.eq.s32.totalorder %s23, 1
      %p83 = por %p81, %p82
      %p84 = scmp.ne.s32.totalorder %s75, %s76
      %p85 = scmp.eq.s32.totalorder %s23, 0
      %p86 = por %p84, %p85
      %p87 = scmp.ne.s32.totalorder %s75, %s76
      %p88 = scmp.eq.s32.totalorder %s24, 1
      %p89 = por %p87, %p88
      %p91 = scmp.ne.s32.totalorder %s76, %s90
      %p92 = scmp.eq.s32.totalorder %s24, 0
      %p93 = por %p91, %p92
      %s95 = sadd.s32 %s94, 1
      %p98 = scmp.eq.s32.totalorder %s18, 1
      %p99 = scmp.ne.s32.totalorder %s94, %s96
      %p100 = scmp.eq.s32.totalorder %s18, 0
      %p101 = por %p99, %p100
      %p102 = scmp.ne.s32.totalorder %s94, %s96
      %p103 = scmp.eq.s32.totalorder %s23, 1
      %p104 = por %p102, %p103
      %p105 = scmp.ne.s32.totalorder %s96, %s97
      %p106 = scmp.eq.s32.totalorder %s23, 0
      %p107 = por %p105, %p106
      %p108 = scmp.ne.s32.totalorder %s96, %s97
      %p109 = scmp.eq.s32.totalorder %s24, 1
      %p110 = por %p108, %p109
      %p112 = scmp.ne.s32.totalorder %s97, %s111
      %p113 = scmp.eq.s32.totalorder %s24, 0
      %p114 = por %p112, %p113
      %s116 = sadd.s32 %s115, 1
      %p119 = scmp.eq.s32.totalorder %s18, 1
      %p120 = scmp.ne.s32.totalorder %s115, %s117
      %p121 = scmp.eq.s32.totalorder %s18, 0
      %p122 = por %p120, %p121
      %p123 = scmp.ne.s32.totalorder %s115, %s117
      %p124 = scmp.eq.s32.totalorder %s23, 1
      %p125 = por %p123, %p124
      %p126 = scmp.ne.s32.totalorder %s117, %s118
      %p127 = scmp.eq.s32.totalorder %s23, 0
      %p128 = por %p126, %p127
      %p129 = scmp.ne.s32.totalorder %s117, %s118
      %p130 = scmp.eq.s32.totalorder %s24, 1
      %p131 = por %p129, %p130
      %p133 = scmp.ne.s32.totalorder %s118, %s132
      %p134 = scmp.eq.s32.totalorder %s24, 0
      %p135 = por %p133, %p134
      %s137 = sadd.s32 %s136, 1
      %p140 = scmp.eq.s32.totalorder %s18, 1
      %p141 = scmp.ne.s32.totalorder %s136, %s138
      %p142 = scmp.eq.s32.totalorder %s18, 0
      %p143 = por %p141, %p142
      %p144 = scmp.ne.s32.totalorder %s136, %s138
      %p145 = scmp.eq.s32.totalorder %s23, 1
      %p146 = por %p144, %p145
      %p147 = scmp.ne.s32.totalorder %s138, %s139
      %p148 = scmp.eq.s32.totalorder %s23, 0
      %p149 = por %p147, %p148
      %p150 = scmp.ne.s32.totalorder %s138, %s139
      %p151 = scmp.eq.s32.totalorder %s24, 1
      %p152 = por %p150, %p151
      %p154 = scmp.ne.s32.totalorder %s139, %s153
      %p155 = scmp.eq.s32.totalorder %s24, 0
      %p156 = por %p154, %p155
      %s158 = sadd.s32 %s157, 1
      %p161 = scmp.eq.s32.totalorder %s18, 1
      %p162 = scmp.ne.s32.totalorder %s157, %s159
      %p163 = scmp.eq.s32.totalorder %s18, 0
      %p164 = por %p162, %p163
      %p165 = scmp.ne.s32.totalorder %s157, %s159
      %p166 = scmp.eq.s32.totalorder %s23, 1
      %p167 = por %p165, %p166
      %p168 = scmp.ne.s32.totalorder %s159, %s160
      %p169 = scmp.eq.s32.totalorder %s23, 0
      %p170 = por %p168, %p169
      %p171 = scmp.ne.s32.totalorder %s159, %s160
      %p172 = scmp.eq.s32.totalorder %s24, 1
      %p173 = por %p171, %p172
      %p175 = scmp.ne.s32.totalorder %s160, %s174
      %p176 = scmp.eq.s32.totalorder %s24, 0
      %p177 = por %p175, %p176
      %s178 = ssub.s32 %s18, %s25
      %p179 = scmp.eq.s32.totalorder %s178, 0
      %s181 = sadd.s32 %s180, 1
      %s182 = scalar_select %p179, %s180, %s181
      %p185 = pneg %p179
      %p186 = scmp.eq.s32.totalorder %s18, 1
      %p187 = por %p185, %p186
      %p188 = scmp.ne.s32.totalorder %s180, %s183
      %p189 = scmp.eq.s32.totalorder %s18, 0
      %p190 = por %p188, %p189
      %p191 = scmp.ne.s32.totalorder %s180, %s183
      %p192 = scmp.eq.s32.totalorder %s23, 1
      %p193 = por %p191, %p192
      %p194 = scmp.ne.s32.totalorder %s183, %s184
      %p195 = scmp.eq.s32.totalorder %s23, 0
      %p196 = por %p194, %p195
      %p197 = scmp.ne.s32.totalorder %s183, %s184
      %p198 = scmp.eq.s32.totalorder %s24, 1
      %p199 = por %p197, %p198
      %p201 = scmp.ne.s32.totalorder %s184, %s200
      %p202 = scmp.eq.s32.totalorder %s24, 0
      %p203 = por %p201, %p202
      %p204 = scmp.le.s32.totalorder 1, %s18
      %p205 = scmp.lt.s32.totalorder %s18, 3
      %p206 = pnand %p204, %p205
      %p207 = pneg %p206
      // Predicated region
      $region9: #{residual_mlp.1} parent=5 // pred_check
        _
      $region10: #{residual_mlp.1} parent=5 // pred_check_branch
        %209 = sbr.rel (%p206) target = $region12
      $region11: #{residual_mlp.1} parent=5 // pred_region
        %s210 = ssub.s32 %s18, 1
        // Predicated region
        $region13: #{residual_mlp.1} parent=11 // pred_check
          %p211 = pneg %p65
        $region14: #{residual_mlp.1} parent=11 // pred_check_branch
          %213 = sbr.rel (%p211) target = $region16
        $region15: #{residual_mlp.1} parent=11 // pred_region
          _
        $region16: #{residual_mlp.1} parent=11 // pred_fallthru
          _
        // Predicated region
        $region17: #{residual_mlp.1} parent=11 // pred_check
          %p214 = pneg %p86
        $region18: #{residual_mlp.1} parent=11 // pred_check_branch
          %216 = sbr.rel (%p214) target = $region20
        $region19: #{residual_mlp.1} parent=11 // pred_region
          %s218 = ssub.s32 16, 16
          %219 = vsyncadd [#allocation3], %s218
          %s221 = sshll.u32 [#allocation2], 4
          %s222 = int_to_ptr.vmem [resolvable:$true] %s221
          %224 = dma.hbm_to_vmem [thread:$0]  %s2, 16, %s222, [#allocation3]
        $region20: #{residual_mlp.1} parent=11 // pred_fallthru
          _
        // Predicated region
        $region21: #{residual_mlp.1} parent=11 // pred_check
          %p225 = pneg %p107
        $region22: #{residual_mlp.1} parent=11 // pred_check_branch
          %227 = sbr.rel (%p225) target = $region24
        $region23: #{residual_mlp.1} parent=11 // pred_region
          _
        $region24: #{residual_mlp.1} parent=11 // pred_fallthru
          _
        // Predicated region
        $region25: #{residual_mlp.1} parent=11 // pred_check
          %p228 = pneg %p128
        $region26: #{residual_mlp.1} parent=11 // pred_check_branch
          %230 = sbr.rel (%p228) target = $region28
        $region27: #{residual_mlp.1} parent=11 // pred_region
          %s232 = ssub.s32 16, 16
          %233 = vsyncadd [#allocation6], %s232
          %s235 = sshll.u32 [#allocation5], 4
          %s236 = int_to_ptr.vmem [resolvable:$true] %s235
          %238 = dma.hbm_to_vmem [thread:$0]  %s4, 16, %s236, [#allocation6]
        $region28: #{residual_mlp.1} parent=11 // pred_fallthru
          _
        // Predicated region
        $region29: #{residual_mlp.1} parent=11 // pred_check
          %p239 = pneg %p149
        $region30: #{residual_mlp.1} parent=11 // pred_check_branch
          %241 = sbr.rel (%p239) target = $region32
        $region31: #{residual_mlp.1} parent=11 // pred_region
          _
        $region32: #{residual_mlp.1} parent=11 // pred_fallthru
          _
        // Predicated region
        $region33: #{residual_mlp.1} parent=11 // pred_check
          %p242 = pneg %p170
        $region34: #{residual_mlp.1} parent=11 // pred_check_branch
          %244 = sbr.rel (%p242) target = $region36
        $region35: #{residual_mlp.1} parent=11 // pred_region
          _
        $region36: #{residual_mlp.1} parent=11 // pred_fallthru
          _
      $region12: #{residual_mlp.1} parent=5 // pred_fallthru
        _
      %p245 = scmp.lt.s32.totalorder %s18, 2
      // Predicated region
      $region37: #{residual_mlp.1} parent=5 // pred_check
        %p246 = pneg %p245
      $region38: #{residual_mlp.1} parent=5 // pred_check_branch
        %248 = sbr.rel (%p246) target = $region40
      $region39: #{residual_mlp.1} parent=5 // pred_region
        // Predicated region
        $region41: #{residual_mlp.1} parent=39 // pred_check
          %p249 = pneg %p38
        $region42: #{residual_mlp.1} parent=39 // pred_check_branch
          %251 = sbr.rel (%p249) target = $region44
        $region43: #{residual_mlp.1} parent=39 // pred_region
          %p252 = scmp.lt.s32.totalorder %s18, 1
          %s253 = scalar_select %p252, %s18, 1
          %s254 = smul.addr %s253, 8
          %s255 = scalar_lea.vmem %s0, %s254
        $region44: #{residual_mlp.1} parent=39 // pred_fallthru
          _
      $region40: #{residual_mlp.1} parent=5 // pred_fallthru
        _
      %p256 = scmp.le.s32.totalorder 1, %s18
      %p257 = scmp.lt.s32.totalorder %s18, 3
      %p258 = pnand %p256, %p257
      %p259 = pneg %p258
      // Predicated region
      $region45: #{residual_mlp.1} parent=5 // pred_check
        _
      $region46: #{residual_mlp.1} parent=5 // pred_check_branch
        %261 = sbr.rel (%p258) target = $region48
      $region47: #{residual_mlp.1} parent=5 // pred_region
        %s262 = ssub.s32 %s18, 1
        // Predicated region
        $region49: #{residual_mlp.1} parent=47 // pred_check
          %p263 = pneg %p86
        $region50: #{residual_mlp.1} parent=47 // pred_check_branch
          %265 = sbr.rel (%p263) target = $region52
        $region51: #{residual_mlp.1} parent=47 // pred_region
          %266 = dma.done [#allocation3], 16
        $region52: #{residual_mlp.1} parent=47 // pred_fallthru
          _
        // Predicated region
        $region53: #{residual_mlp.1} parent=47 // pred_check
          %p267 = pneg %p128
        $region54: #{residual_mlp.1} parent=47 // pred_check_branch
          %269 = sbr.rel (%p267) target = $region56
        $region55: #{residual_mlp.1} parent=47 // pred_region
          %270 = dma.done [#allocation6], 16
        $region56: #{residual_mlp.1} parent=47 // pred_fallthru
          _
        %p271 = scmp.lt.s32.totalorder %s23, 1
        %s272 = scalar_select %p271, %s23, 1
        %s273 = smul.addr %s272, 8
        %s274 = scalar_lea.vmem %s0, %s273
        %p275 = pneg %p44
        %p276 = pneg %p41
        %p277 = pneg %p65
        %p278 = pneg %p62
        %p279 = pneg %p86
        %p280 = pneg %p83
        %p281 = pneg %p107
        %p282 = pneg %p104
        %p283 = pneg %p128
        %p284 = pneg %p125
        %p285 = pneg %p149
        %p286 = pneg %p146
        %p287 = pneg %p170
        %p288 = pneg %p167
        %p289 = pneg %p196
        %p290 = pneg %p193
        %s291 = sand.u32 %s183, 1
        %s292 = scalar_lea.sflag [#allocation4], %s291
        %s293 = sand.u32 %s183, 1
        %s294 = smul.addr %s293, 16
        %s295 = scalar_lea.vmem [#allocation7], %s294
        %p296 = scmp.lt.s32.totalorder %s23, 1
        %s297 = scalar_select %p296, %s23, 1
        %s298 = smul.addr %s297, 8
        %s299 = scalar_lea.vmem %s0, %s298
        %v300 = vld [vmem:[%s299] sm:$0xff]
        %v301 = vld [vmem:[%s1] sm:$0xff]
        %v302 = vld [vmem:[%s1 + $0x8] sm:$0xff]
        %v303 = vld [vmem:[%s1 + $0x10] sm:$0xff]
        %v304 = vld [vmem:[%s1 + $0x18] sm:$0xff]
        %v305 = vld [vmem:[%s1 + $0x20] sm:$0xff]
        %v306 = vld [vmem:[%s1 + $0x28] sm:$0xff]
        %v307 = vld [vmem:[%s1 + $0x30] sm:$0xff]
        %v308 = vld [vmem:[%s1 + $0x38] sm:$0xff]
        %v309 = vld [vmem:[%s1 + $0x40] sm:$0xff]
        %v310 = vld [vmem:[%s1 + $0x48] sm:$0xff]
        %v311 = vld [vmem:[%s1 + $0x50] sm:$0xff]
        %v312 = vld [vmem:[%s1 + $0x58] sm:$0xff]
        %v313 = vld [vmem:[%s1 + $0x60] sm:$0xff]
        %v314 = vld [vmem:[%s1 + $0x68] sm:$0xff]
        %v315 = vld [vmem:[%s1 + $0x70] sm:$0xff]
        %v316 = vld [vmem:[%s1 + $0x78] sm:$0xff]
        %v317 = vld [vmem:[#allocation2] sm:$0x1]
        %v319 = vlaneseq
        %v320 = vshrl.u32 %v319, 7
        %v321 = vsub.s32 0, %v320
        %v322 = vrot.slane %v317, %v321
        %324 = vmatprep.subr.mxu0 0.0
        %325 = vmatpush1.msra.mxu0 %v301
        %326 = vmatprep.subr.mxu0 0.0
        %327 = vmatpush1.msra.mxu0 %v302
        %328 = vmatprep.subr.mxu0 0.0
        %329 = vmatpush1.msra.mxu0 %v303
        %330 = vmatprep.subr.mxu0 0.0
        %331 = vmatpush1.msra.mxu0 %v304
        %332 = vmatprep.subr.mxu0 0.0
        %333 = vmatpush1.msra.mxu0 %v305
        %334 = vmatprep.subr.mxu0 0.0
        %335 = vmatpush1.msra.mxu0 %v306
        %336 = vmatprep.subr.mxu0 0.0
        %337 = vmatpush1.msra.mxu0 %v307
        %338 = vmatprep.subr.mxu0 0.0
        %339 = vmatpush1.msra.mxu0 %v308
        %340 = vmatprep.subr.mxu0 0.0
        %341 = vmatpush1.msra.mxu0 %v309
        %342 = vmatprep.subr.mxu0 0.0
        %343 = vmatpush1.msra.mxu0 %v310
        %344 = vmatprep.subr.mxu0 0.0
        %345 = vmatpush1.msra.mxu0 %v311
        %346 = vmatprep.subr.mxu0 0.0
        %347 = vmatpush1.msra.mxu0 %v312
        %348 = vmatprep.subr.mxu0 0.0
        %349 = vmatpush1.msra.mxu0 %v313
        %350 = vmatprep.subr.mxu0 0.0
        %351 = vmatpush1.msra.mxu0 %v314
        %352 = vmatprep.subr.mxu0 0.0
        %353 = vmatpush1.msra.mxu0 %v315
        %354 = vmatprep.subr.mxu0 0.0
        %355 = vmatpush1.msra.mxu0 %v316
        %356 = vmatprep.subr.mxu0 0.0
        %357 = vmatpush1.msra.mxu0 0.0
        %358 = vmatprep.subr.mxu0 0.0
        %359 = vmatpush1.msra.mxu0 0.0
        %360 = vmatprep.subr.mxu0 0.0
        %361 = vmatpush1.msra.mxu0 0.0
        %362 = vmatprep.subr.mxu0 0.0
        %363 = vmatpush1.msra.mxu0 0.0
        %364 = vmatprep.subr.mxu0 0.0
        %365 = vmatpush1.msra.mxu0 0.0
        %366 = vmatprep.subr.mxu0 0.0
        %367 = vmatpush1.msra.mxu0 0.0
        %368 = vmatprep.subr.mxu0 0.0
        %369 = vmatpush1.msra.mxu0 0.0
        %370 = vmatprep.subr.mxu0 0.0
        %371 = vmatpush1.msra.mxu0 0.0
        %372 = vmatprep.subr.mxu0 0.0
        %373 = vmatpush1.msra.mxu0 0.0
        %374 = vmatprep.subr.mxu0 0.0
        %375 = vmatpush1.msra.mxu0 0.0
        %376 = vmatprep.subr.mxu0 0.0
        %377 = vmatpush1.msra.mxu0 0.0
        %378 = vmatprep.subr.mxu0 0.0
        %379 = vmatpush1.msra.mxu0 0.0
        %380 = vmatprep.subr.mxu0 0.0
        %381 = vmatpush1.msra.mxu0 0.0
        %382 = vmatprep.subr.mxu0 0.0
        %383 = vmatpush1.msra.mxu0 0.0
        %384 = vmatprep.subr.mxu0 0.0
        %385 = vmatpush1.msra.mxu0 0.0
        %386 = vmatprep.subr.mxu0 0.0
        %387 = vmatpush1.msra.mxu0 0.0
        %388 = vmatprep.mubr.f32.mxu0 0.0
        %389 = vmatmul.mubr.f32.gmra.mrb[0].mxu0 %v300
        %v390 = vpop.f32.mrb[0].mxu0
        %v391 = vadd.f32 %v322, %v390
        %v392 = vpop.f32.mrb[0].mxu0
        %393 = vdwg.mxu0
        %v394 = vmul.f32 %v391, 0.5
        %v395 = vmul.f32 %v391, 0.70710677
        %v396 = vand.u32 2147483647, %v395
        %v397 = vmul.f32 %v396, 0.3275911
        %v398 = vadd.f32 %v397, 1.0
        %v399 = vrcp.pop %v398
        %v400 = vmul.f32 1.0, %v399
        %v401 = vmul.f32 %v400, 1.0614054
        %v402 = vadd.f32 %v401, -1.4531521
        %v403 = vmul.f32 %v402, %v400
        %v404 = vadd.f32 %v403, 1.4214138
        %v405 = vmul.f32 %v404, %v400
        %v406 = vadd.f32 %v405, -0.28449672
        %v407 = vmul.f32 %v406, %v400
        %v408 = vadd.f32 %v407, 0.2548296
        %v409 = vmul.f32 %v408, %v400
        %v410 = vsub.f32 0.0, %v396
        %v411 = vmul.f32 %v410, %v396
        %v412 = vmul.f32 %v411, 1.442695
        %v413 = vpow.pop %v412
        %v414 = vmul.f32 %v409, %v413
        %v415 = vsub.f32 1.0, %v414
        %vm416 = vcmp.lt.f32.partialorder %v395, 0.0
        %v417 = vsub.f32 0.0, %v415
        %v418 = vsel %vm416, %v417, %v415
        %v419 = vadd.f32 %v418, 1.0
        %v420 = vmul.f32 %v394, %v419
        %v421 = vld [vmem:[%s3] sm:$0xff]
        %v422 = vld [vmem:[%s3 + $0x8] sm:$0xff]
        %v423 = vld [vmem:[%s3 + $0x10] sm:$0xff]
        %v424 = vld [vmem:[%s3 + $0x18] sm:$0xff]
        %v425 = vld [vmem:[%s3 + $0x20] sm:$0xff]
        %v426 = vld [vmem:[%s3 + $0x28] sm:$0xff]
        %v427 = vld [vmem:[%s3 + $0x30] sm:$0xff]
        %v428 = vld [vmem:[%s3 + $0x38] sm:$0xff]
        %v429 = vld [vmem:[#allocation5] sm:$0x1]
        %v431 = vlaneseq
        %v432 = vshrl.u32 %v431, 7
        %v433 = vsub.s32 0, %v432
        %v434 = vrot.slane %v429, %v433
        %vm436 = vcmask 523264
        %v438 = vsel %vm436, %v420, 0
        %440 = vmatprep.subr.mxu0 0.0
        %441 = vmatpush1.msra.mxu0 %v421
        %442 = vmatprep.subr.mxu0 0.0
        %443 = vmatpush1.msra.mxu0 %v422
        %444 = vmatprep.subr.mxu0 0.0
        %445 = vmatpush1.msra.mxu0 %v423
        %446 = vmatprep.subr.mxu0 0.0
        %447 = vmatpush1.msra.mxu0 %v424
        %448 = vmatprep.subr.mxu0 0.0
        %449 = vmatpush1.msra.mxu0 %v425
        %450 = vmatprep.subr.mxu0 0.0
        %451 = vmatpush1.msra.mxu0 %v426
        %452 = vmatprep.subr.mxu0 0.0
        %453 = vmatpush1.msra.mxu0 %v427
        %454 = vmatprep.subr.mxu0 0.0
        %455 = vmatpush1.msra.mxu0 %v428
        %456 = vmatprep.subr.mxu0 0.0
        %457 = vmatpush1.msra.mxu0 0.0
        %458 = vmatprep.subr.mxu0 0.0
        %459 = vmatpush1.msra.mxu0 0.0
        %460 = vmatprep.subr.mxu0 0.0
        %461 = vmatpush1.msra.mxu0 0.0
        %462 = vmatprep.subr.mxu0 0.0
        %463 = vmatpush1.msra.mxu0 0.0
        %464 = vmatprep.subr.mxu0 0.0
        %465 = vmatpush1.msra.mxu0 0.0
        %466 = vmatprep.subr.mxu0 0.0
        %467 = vmatpush1.msra.mxu0 0.0
        %468 = vmatprep.subr.mxu0 0.0
        %469 = vmatpush1.msra.mxu0 0.0
        %470 = vmatprep.subr.mxu0 0.0
        %471 = vmatpush1.msra.mxu0 0.0
        %472 = vmatprep.subr.mxu0 0.0
        %473 = vmatpush1.msra.mxu0 0.0
        %474 = vmatprep.subr.mxu0 0.0
        %475 = vmatpush1.msra.mxu0 0.0
        %476 = vmatprep.subr.mxu0 0.0
        %477 = vmatpush1.msra.mxu0 0.0
        %478 = vmatprep.subr.mxu0 0.0
        %479 = vmatpush1.msra.mxu0 0.0
        %480 = vmatprep.subr.mxu0 0.0
        %481 = vmatpush1.msra.mxu0 0.0
        %482 = vmatprep.subr.mxu0 0.0
        %483 = vmatpush1.msra.mxu0 0.0
        %484 = vmatprep.subr.mxu0 0.0
        %485 = vmatpush1.msra.mxu0 0.0
        %486 = vmatprep.subr.mxu0 0.0
        %487 = vmatpush1.msra.mxu0 0.0
        %488 = vmatprep.subr.mxu0 0.0
        %489 = vmatpush1.msra.mxu0 0.0
        %490 = vmatprep.subr.mxu0 0.0
        %491 = vmatpush1.msra.mxu0 0.0
        %492 = vmatprep.subr.mxu0 0.0
        %493 = vmatpush1.msra.mxu0 0.0
        %494 = vmatprep.subr.mxu0 0.0
        %495 = vmatpush1.msra.mxu0 0.0
        %496 = vmatprep.subr.mxu0 0.0
        %497 = vmatpush1.msra.mxu0 0.0
        %498 = vmatprep.subr.mxu0 0.0
        %499 = vmatpush1.msra.mxu0 0.0
        %500 = vmatprep.subr.mxu0 0.0
        %501 = vmatpush1.msra.mxu0 0.0
        %502 = vmatprep.subr.mxu0 0.0
        %503 = vmatpush1.msra.mxu0 0.0
        %504 = vmatprep.mubr.f32.mxu0 0.0
        %505 = vmatmul.mubr.f32.gmra.mrb[0].mxu0 %v438
        %v506 = vpop.f32.mrb[0].mxu0
        %v507 = vadd.f32 %v434, %v506
        %v508 = vpop.f32.mrb[0].mxu0
        %509 = vdwg.mxu0
        %v510 = vmul.f32 %v507, 0.5
        %v511 = vmul.f32 %v507, 0.70710677
        %v512 = vand.u32 2147483647, %v511
        %v513 = vmul.f32 %v512, 0.3275911
        %v514 = vadd.f32 %v513, 1.0
        %v515 = vrcp.pop %v514
        %v516 = vmul.f32 1.0, %v515
        %v517 = vmul.f32 %v516, 1.0614054
        %v518 = vadd.f32 %v517, -1.4531521
        %v519 = vmul.f32 %v518, %v516
        %v520 = vadd.f32 %v519, 1.4214138
        %v521 = vmul.f32 %v520, %v516
        %v522 = vadd.f32 %v521, -0.28449672
        %v523 = vmul.f32 %v522, %v516
        %v524 = vadd.f32 %v523, 0.2548296
        %v525 = vmul.f32 %v524, %v516
        %v526 = vsub.f32 0.0, %v512
        %v527 = vmul.f32 %v526, %v512
        %v528 = vmul.f32 %v527, 1.442695
        %v529 = vpow.pop %v528
        %v530 = vmul.f32 %v525, %v529
        %v531 = vsub.f32 1.0, %v530
        %vm532 = vcmp.lt.f32.partialorder %v511, 0.0
        %v533 = vsub.f32 0.0, %v531
        %v534 = vsel %vm532, %v533, %v531
        %v535 = vadd.f32 %v534, 1.0
        %v536 = vmul.f32 %v510, %v535
        %v537 = vld [vmem:[%s5] sm:$0xff]
        %v538 = vld [vmem:[%s5 + $0x8] sm:$0xff]
        %v539 = vld [vmem:[%s5 + $0x10] sm:$0xff]
        %v540 = vld [vmem:[%s5 + $0x18] sm:$0xff]
        %v541 = vld [vmem:[%s5 + $0x20] sm:$0xff]
        %v542 = vld [vmem:[%s5 + $0x28] sm:$0xff]
        %v543 = vld [vmem:[%s5 + $0x30] sm:$0xff]
        %v544 = vld [vmem:[%s5 + $0x38] sm:$0xff]
        %v545 = vld [vmem:[%s5 + $0x40] sm:$0xff]
        %v546 = vld [vmem:[%s5 + $0x48] sm:$0xff]
        %v547 = vld [vmem:[%s5 + $0x50] sm:$0xff]
        %v548 = vld [vmem:[%s5 + $0x58] sm:$0xff]
        %v549 = vld [vmem:[%s5 + $0x60] sm:$0xff]
        %v550 = vld [vmem:[%s5 + $0x68] sm:$0xff]
        %v551 = vld [vmem:[%s5 + $0x70] sm:$0xff]
        %v552 = vld [vmem:[%s5 + $0x78] sm:$0xff]
        %v553 = vld [vmem:[%s6] sm:$0x3]
        %v555 = vlaneseq
        %v556 = vshrl.u32 %v555, 7
        %v557 = vsub.s32 0, %v556
        %v558 = vrot.slane %v553, %v557
        %v559 = vlaneseq
        %v560 = vshrl.u32 %v559, 7
        %v561 = vsub.s32 1, %v560
        %v562 = vrot.slane %v553, %v561
        %v566 = vsel %vm436, %v536, 0
        %568 = vmatprep.subr.mxu0 %v538
        %569 = vmatpush1.msra.mxu0 %v537
        %570 = vmatprep.subr.mxu0 %v540
        %571 = vmatpush1.msra.mxu0 %v539
        %572 = vmatprep.subr.mxu0 %v542
        %573 = vmatpush1.msra.mxu0 %v541
        %574 = vmatprep.subr.mxu0 %v544
        %575 = vmatpush1.msra.mxu0 %v543
        %576 = vmatprep.subr.mxu0 %v546
        %577 = vmatpush1.msra.mxu0 %v545
        %578 = vmatprep.subr.mxu0 %v548
        %579 = vmatpush1.msra.mxu0 %v547
        %580 = vmatprep.subr.mxu0 %v550
        %581 = vmatpush1.msra.mxu0 %v549
        %582 = vmatprep.subr.mxu0 %v552
        %583 = vmatpush1.msra.mxu0 %v551
        %584 = vmatprep.subr.mxu0 0.0
        %585 = vmatpush1.msra.mxu0 0.0
        %586 = vmatprep.subr.mxu0 0.0
        %587 = vmatpush1.msra.mxu0 0.0
        %588 = vmatprep.subr.mxu0 0.0
        %589 = vmatpush1.msra.mxu0 0.0
        %590 = vmatprep.subr.mxu0 0.0
        %591 = vmatpush1.msra.mxu0 0.0
        %592 = vmatprep.subr.mxu0 0.0
        %593 = vmatpush1.msra.mxu0 0.0
        %594 = vmatprep.subr.mxu0 0.0
        %595 = vmatpush1.msra.mxu0 0.0
        %596 = vmatprep.subr.mxu0 0.0
        %597 = vmatpush1.msra.mxu0 0.0
        %598 = vmatprep.subr.mxu0 0.0
        %599 = vmatpush1.msra.mxu0 0.0
        %600 = vmatprep.subr.mxu0 0.0
        %601 = vmatpush1.msra.mxu0 0.0
        %602 = vmatprep.subr.mxu0 0.0
        %603 = vmatpush1.msra.mxu0 0.0
        %604 = vmatprep.subr.mxu0 0.0
        %605 = vmatpush1.msra.mxu0 0.0
        %606 = vmatprep.subr.mxu0 0.0
        %607 = vmatpush1.msra.mxu0 0.0
        %608 = vmatprep.subr.mxu0 0.0
        %609 = vmatpush1.msra.mxu0 0.0
        %610 = vmatprep.subr.mxu0 0.0
        %611 = vmatpush1.msra.mxu0 0.0
        %612 = vmatprep.subr.mxu0 0.0
        %613 = vmatpush1.msra.mxu0 0.0
        %614 = vmatprep.subr.mxu0 0.0
        %615 = vmatpush1.msra.mxu0 0.0
        %616 = vmatprep.subr.mxu0 0.0
        %617 = vmatpush1.msra.mxu0 0.0
        %618 = vmatprep.subr.mxu0 0.0
        %619 = vmatpush1.msra.mxu0 0.0
        %620 = vmatprep.subr.mxu0 0.0
        %621 = vmatpush1.msra.mxu0 0.0
        %622 = vmatprep.subr.mxu0 0.0
        %623 = vmatpush1.msra.mxu0 0.0
        %624 = vmatprep.subr.mxu0 0.0
        %625 = vmatpush1.msra.mxu0 0.0
        %626 = vmatprep.subr.mxu0 0.0
        %627 = vmatpush1.msra.mxu0 0.0
        %628 = vmatprep.subr.mxu0 0.0
        %629 = vmatpush1.msra.mxu0 0.0
        %630 = vmatprep.subr.mxu0 0.0
        %631 = vmatpush1.msra.mxu0 0.0
        %632 = vmatprep.mubr.f32.mxu0 0.0
        %633 = vmatmul.mubr.f32.gmra.mrb[0].mxu0 %v566
        %v634 = vpop.f32.mrb[0].mxu0
        %v635 = vadd.f32 %v558, %v634
        %v636 = vpop.f32.mrb[0].mxu0
        %v637 = vadd.f32 %v562, %v636
        %638 = vdwg.mxu0
        %639 = vst [vmem:[%s295] sm:$0xff] %v635
        %vm640 = vcmask 310272
        %641 = vst.msk [vmem:[%s295 + $0x8] sm:$0xff] %vm640, %v637
        %s642 = sand.u32 %s183, 1
        %s643 = scalar_lea.sflag [#allocation4], %s642
        %s644 = sand.u32 %s183, 1
        %s645 = smul.addr %s644, 16
        %s646 = scalar_lea.vmem [#allocation7], %s645
        // Predicated region
        $region57: #{residual_mlp.1} parent=47 // pred_check
          %p647 = pneg %p193
        $region58: #{residual_mlp.1} parent=47 // pred_check_branch
          %649 = sbr.rel (%p647) target = $region60
        $region59: #{residual_mlp.1} parent=47 // pred_region
          %s651 = ssub.s32 256, 256
          %652 = vsyncadd %s643, %s651
          %s653 = smul.addr %s23, 2
          %s654 = smul.addr %s653, 128
          %s655 = scalar_lea.hbm %s7, %s654
          %s657 = sshll.u32 %s646, 4
          %s658 = int_to_ptr.vmem [resolvable:$true] %s657
          %660 = dma.vmem_to_hbm [thread:$0]  %s658, 256, %s655, %s643
        $region60: #{residual_mlp.1} parent=47 // pred_fallthru
          _
      $region48: #{residual_mlp.1} parent=5 // pred_fallthru
        _
      %p661 = scmp.le.s32.totalorder 2, %s18
      // Predicated region
      $region61: #{residual_mlp.1} parent=5 // pred_check
        %p662 = pneg %p661
      $region62: #{residual_mlp.1} parent=5 // pred_check_branch
        %664 = sbr.rel (%p662) target = $region64
      $region63: #{residual_mlp.1} parent=5 // pred_region
        %s665 = ssub.s32 %s18, 2
        // Predicated region
        $region65: #{residual_mlp.1} parent=63 // pred_check
          %p666 = pneg %p199
        $region66: #{residual_mlp.1} parent=63 // pred_check_branch
          %668 = sbr.rel (%p666) target = $region68
        $region67: #{residual_mlp.1} parent=63 // pred_region
          %s669 = sand.u32 %s184, 1
          %s670 = scalar_lea.sflag [#allocation4], %s669
          %s671 = sand.u32 %s184, 1
          %s672 = smul.addr %s671, 16
          %s673 = scalar_lea.vmem [#allocation7], %s672
          %674 = dma.done %s670, 256
        $region68: #{residual_mlp.1} parent=63 // pred_fallthru
          _
      $region64: #{residual_mlp.1} parent=5 // pred_fallthru
        _
    $region6: #{residual_mlp.1} parent=1 // loop_footer
      %s22 = sadd.s32 1, %s18
    $region7: #{residual_mlp.1} parent=1 // loop_footer_branch
      %17 = sbr.rel target = $region3
    $region8: #{residual_mlp.1} parent=1 // loop_exit
      _
    %675 = vsyncpa [#allocation3], 1
    %s676 = scalar_lea.sflag [#allocation3], 1
    %677 = vsyncpa %s676, 1
    %678 = vsyncpa [#allocation6], 1
    %679 = vsyncpa [#allocation4], 1
    %s680 = scalar_lea.sflag [#allocation4], 1
    %681 = vsyncpa %s680, 1

</llo_original>
